<compile_context>
chip_gen: v7x
topology: tpu7x:2x2x1
jax: 0.10.0
libtpu: 0.0.40
codegen_flags: <defaults>
</compile_context>

<pallas_src>
import numpy as np
import jax
import jax.numpy as jnp
from jax.experimental import pallas as pl
from jax.experimental.pallas import tpu as pltpu


# ----------------------------------------------------------------------------
# Fused DynNet forward kernel (batch on lanes, features/hidden on sublanes).
# ----------------------------------------------------------------------------
def dynnet_kernel(x_ref,
                  w1_ref, b1_ref,      # packed layer 1   (3H, 8), (3H, 1)
                  w2_ref, b2_ref,      # packed layer 2   (3H, 3H) block-diag, (3H, 1)
                  w3m_ref, b3m_ref,    # Minv extra layer (H, H), (H, 1)
                  wh_ref, bh_ref,      # packed head      (8, 3H), (8, 1)
                  out_ref):            # (8, T)
    x = x_ref[...]                     # (8, T) f32, rows = [s1..s6, u1, u2]
    H = w3m_ref.shape[0]
    T = x.shape[1]

    # Packed "super-MLP".  One dot covers C/g/Minv first layers (Minv's K=1
    # layer is folded into the packed weight, so no rank-1 MXU push).
    h1 = jnp.tanh(jnp.dot(w1_ref[...], x,
                          preferred_element_type=jnp.float32) + b1_ref[...])   # (3H, T)
    h2 = jnp.tanh(jnp.dot(w2_ref[...], h1,
                          preferred_element_type=jnp.float32) + b2_ref[...])   # (3H, T)
    # Minv's extra hidden layer: small side dot on its H-wide block.
    hm = jnp.tanh(jnp.dot(w3m_ref[...], h2[2 * H:3 * H, :],
                          preferred_element_type=jnp.float32) + b3m_ref[...])  # (H, T)
    # Single packed head -> rows [c0, c1, g0, g1, z0, z1, z2, unused].
    hf = jnp.concatenate([h2[0:2 * H, :], hm], axis=0)                         # (3H, T)
    head = jnp.dot(wh_ref[...], hf,
                   preferred_element_type=jnp.float32) + bh_ref[...]           # (8, T)

    # Per-feature rows (sublane reads, pure VPU from here on).
    s1 = x[0:1, :]; s2 = x[1:2, :]; s3 = x[2:3, :]; s4 = x[3:4, :]
    s5 = x[4:5, :]; s6 = x[5:6, :]
    u0 = x[6:7, :]; u1 = x[7:8, :]

    c0 = head[0:1, :]; c1 = head[1:2, :]
    g0 = head[2:3, :]; g1 = head[3:4, :]
    l00 = head[4:5, :]; l11 = head[5:6, :]; l10 = head[6:7, :]

    # temp = u - C_net(c_feed) - g_net(g_feed)
    t0 = u0 - c0 - g0
    t1 = u1 - c1 - g1

    # D = L L^T + 0.1 I with L = [[l00, 0], [l10, l11]], unrolled on the VPU.
    d00 = l00 * l00 + jnp.float32(0.1)
    d01 = l00 * l10
    d11 = l10 * l10 + l11 * l11 + jnp.float32(0.1)

    # Lane-dense row stores directly into the output slab.
    out_ref[0:1, :] = -s2 * s5                 # d_s1
    out_ref[1:2, :] = s1 * s5                  # d_s2
    out_ref[2:3, :] = -s4 * s6                 # d_s3
    out_ref[3:4, :] = s3 * s6                  # d_s4
    out_ref[4:5, :] = d00 * t0 + d01 * t1      # d_s5  (q1_ddot)
    out_ref[5:6, :] = d01 * t0 + d11 * t1      # d_s6  (q2_ddot)
    out_ref[6:8, :] = jnp.zeros((2, T), jnp.float32)  # d_u1, d_u2


# ----------------------------------------------------------------------------
# Batch-tile selection: lane tiles are multiples of 128; prefer exact division
# (no pad) and >= 2 grid steps (v7x has 2 TensorCores).  Small batches use a
# single full-width tile (block == full dim, so no 128 constraint).
# ----------------------------------------------------------------------------
def _choose_tile(bs, tile_b_max):
    if bs < 256:
        return bs, bs
    cand = 128 * max(1, tile_b_max // 128)
    tb = None
    while cand >= 128:
        if bs % cand == 0 and bs // cand >= 2:
            tb = cand
            break
        cand -= 128
    if tb is None:
        tb = 128                      # ragged batch: pad < 128 columns
    padded = pl.cdiv(bs, tb) * tb
    return tb, padded


# ----------------------------------------------------------------------------
# Wrapper: lane-dense (8, B) I/O, batch grid (parallel), weights VMEM-resident.
# ----------------------------------------------------------------------------
def dynnet_forward(x, packed_params, *, tile_b=512):
    bs = x.shape[0]
    x_t = jnp.asarray(x, jnp.float32).T          # (8, bs) — layout plumbing
    tb, padded = _choose_tile(bs, tile_b)
    if padded != bs:
        x_t = jnp.pad(x_t, ((0, 0), (0, padded - bs)))
    n_tiles = padded // tb

    in_specs = [pl.BlockSpec((8, tb), lambda i: (0, i))]
    in_specs += [pl.BlockSpec(p.shape, lambda i: (0, 0)) for p in packed_params]

    out_t = pl.pallas_call(
        dynnet_kernel,
        out_shape=jax.ShapeDtypeStruct((8, padded), jnp.float32),
        grid=(n_tiles,),
        in_specs=in_specs,
        out_specs=pl.BlockSpec((8, tb), lambda i: (0, i)),
        compiler_params=pltpu.CompilerParams(
            dimension_semantics=("parallel",),
            vmem_limit_bytes=32 * 1024 * 1024,
        ),
    )(x_t, *packed_params)
    return out_t[:, :bs].T                        # back to (bs, 8)


# ----------------------------------------------------------------------------
# Weight packing: block-diagonal super-MLP from the three torch-layout MLPs.
#   x layout: [s1, s2, s3, s4, s5, s6, u1, u2]
#   C_net reads cols 3:6 (s4,s5,s6); g_net cols 0:4 (s1..s4); Minv col 2 (s3).
# ----------------------------------------------------------------------------
def pack_dynnet_params(c_params, g_params, m_params, hidden):
    H = hidden
    (cw1, cb1), (cw2, cb2), (cw3, cb3) = c_params
    (gw1, gb1), (gw2, gb2), (gw3, gb3) = g_params
    (mw1, mb1), (mw2, mb2), (mw3, mb3), (mw4, mb4) = m_params

    W1 = jnp.zeros((3 * H, 8), jnp.float32)
    W1 = (W1.at[0:H, 3:6].set(cw1)
             .at[H:2 * H, 0:4].set(gw1)
             .at[2 * H:3 * H, 2:3].set(mw1))
    b1 = jnp.concatenate([cb1, gb1, mb1]).reshape(3 * H, 1)

    W2 = jnp.zeros((3 * H, 3 * H), jnp.float32)
    W2 = (W2.at[0:H, 0:H].set(cw2)
             .at[H:2 * H, H:2 * H].set(gw2)
             .at[2 * H:3 * H, 2 * H:3 * H].set(mw2))
    b2 = jnp.concatenate([cb2, gb2, mb2]).reshape(3 * H, 1)

    W3m = mw3.astype(jnp.float32)
    b3m = mb3.reshape(H, 1)

    Wh = jnp.zeros((8, 3 * H), jnp.float32)
    Wh = (Wh.at[0:2, 0:H].set(cw3)
             .at[2:4, H:2 * H].set(gw3)
             .at[4:7, 2 * H:3 * H].set(mw4))
    bh = jnp.zeros((8,), jnp.float32)
    bh = bh.at[0:2].set(cb3).at[2:4].set(gb3).at[4:7].set(mb4).reshape(8, 1)

    return (W1, b1, W2, b2, W3m, b3m, Wh, bh)


# ----------------------------------------------------------------------------
# Deterministic parameter construction, torch.nn.Linear layout: W (out, in),
# b (out,).  Everything f32.
# ----------------------------------------------------------------------------
def make_mlp_params(key, dims):
    params = []
    for (out_d, in_d) in dims:
        key, kw, kb = jax.random.split(key, 3)
        bound = 1.0 / np.sqrt(in_d)
        w = jax.random.normal(kw, (out_d, in_d), dtype=jnp.float32) * bound
        b = jax.random.uniform(kb, (out_d,), minval=-bound, maxval=bound,
                               dtype=jnp.float32)
        params.append((w, b))
    return params


# ----------------------------------------------------------------------------
# Pure-JAX reference of DynNet.forward (for correctness checks).
# ----------------------------------------------------------------------------
def dynnet_reference(x, c_params, g_params, m_params):
    bs = x.shape[0]
    s1, s2, s3, s4, s5, s6 = [x[:, i:i + 1] for i in range(6)]
    u = x[:, 6:8]

    def mlp3(inp, params):
        (w1, b1), (w2, b2), (w3, b3) = params
        h = jnp.tanh(inp @ w1.T + b1)
        h = jnp.tanh(h @ w2.T + b2)
        return h @ w3.T + b3

    c_out = mlp3(x[:, 3:6], c_params)
    g_out = mlp3(x[:, 0:4], g_params)
    temp = u - c_out - g_out

    (w1, b1), (w2, b2), (w3, b3), (w4, b4) = m_params
    h = jnp.tanh(s3 @ w1.T + b1)
    h = jnp.tanh(h @ w2.T + b2)
    h = jnp.tanh(h @ w3.T + b3)
    z = h @ w4.T + b4                                   # (bs, 3)
    L = jnp.zeros((bs, 2, 2), dtype=jnp.float32)
    L = L.at[:, 0, 0].set(z[:, 0]).at[:, 1, 1].set(z[:, 1]).at[:, 1, 0].set(z[:, 2])
    D = jnp.einsum('bij,bkj->bik', L, L) + 0.1 * jnp.eye(2, dtype=jnp.float32)[None]
    ddot = jnp.einsum('bij,bj->bi', D, temp)

    d_s1 = -s2 * s5
    d_s2 = s1 * s5
    d_s3 = -s4 * s6
    d_s4 = s3 * s6
    zeros = jnp.zeros((bs, 2), dtype=jnp.float32)
    return jnp.concatenate([d_s1, d_s2, d_s3, d_s4, ddot, zeros], axis=1)


if __name__ == "__main__":
    hidden = 32
    u_dim, diag_dim = 2, 2
    off_diag = diag_dim * (diag_dim - 1) // 2

    key = jax.random.PRNGKey(0)
    kx, kc, kg, km = jax.random.split(key, 4)

    c_params = make_mlp_params(kc, [(hidden, 3), (hidden, hidden), (u_dim, hidden)])
    g_params = make_mlp_params(kg, [(hidden, 4), (hidden, hidden), (u_dim, hidden)])
    m_params = make_mlp_params(km, [(hidden, 1), (hidden, hidden),
                                    (hidden, hidden), (diag_dim + off_diag, hidden)])
    packed = pack_dynnet_params(c_params, g_params, m_params, hidden)

    # state layout: [cos q1, sin q1, cos q2, sin q2, q1_dot, q2_dot, u1, u2]
    # Small batch -> single full-width tile.
    x_small = jax.random.normal(kx, (8, 8), dtype=jnp.float32)
    out_small = jax.block_until_ready(dynnet_forward(x_small, packed))
    ref_small = dynnet_reference(x_small, c_params, g_params, m_params)
    np.testing.assert_allclose(np.asarray(out_small), np.asarray(ref_small),
                               rtol=5e-5, atol=5e-5)

    # Larger batch -> multiple 128-wide lane tiles (megacore-parallel grid).
    x_big = jax.random.normal(jax.random.PRNGKey(1), (384, 8), dtype=jnp.float32)
    out_big = jax.block_until_ready(dynnet_forward(x_big, packed))
    ref_big = dynnet_reference(x_big, c_params, g_params, m_params)
    np.testing.assert_allclose(np.asarray(out_big), np.asarray(ref_big),
                               rtol=5e-5, atol=5e-5)

    print("KERNEL_OK")
</pallas_src>

<mosaic_0001>
module attributes {stable_mosaic.version = 11 : i64} {
  func.func @dynnet_kernel(%arg0: i32, %arg1: memref<8x8xf32, #tpu.memory_space<vmem>>, %arg2: memref<96x8xf32, #tpu.memory_space<vmem>>, %arg3: memref<96x1xf32, #tpu.memory_space<vmem>>, %arg4: memref<96x96xf32, #tpu.memory_space<vmem>>, %arg5: memref<96x1xf32, #tpu.memory_space<vmem>>, %arg6: memref<32x32xf32, #tpu.memory_space<vmem>>, %arg7: memref<32x1xf32, #tpu.memory_space<vmem>>, %arg8: memref<8x96xf32, #tpu.memory_space<vmem>>, %arg9: memref<8x1xf32, #tpu.memory_space<vmem>>, %arg10: memref<8x8xf32, #tpu.memory_space<vmem>>) attributes {dimension_semantics = [#tpu.dimension_semantics<parallel>], iteration_bounds = array<i64: 1>, scalar_prefetch = 0 : i64, scratch_operands = 0 : i64, tpu.core_type = #tpu.core_type<tc>, window_params = [{transform_indices = @transform_0, window_bounds = array<i64: 8, 8>}, {pipeline_mode = #tpu.pipeline_mode<synchronous>, transform_indices = @transform_1, window_bounds = array<i64: 96, 8>}, {pipeline_mode = #tpu.pipeline_mode<synchronous>, transform_indices = @transform_2, window_bounds = array<i64: 96, 1>}, {pipeline_mode = #tpu.pipeline_mode<synchronous>, transform_indices = @transform_3, window_bounds = array<i64: 96, 96>}, {pipeline_mode = #tpu.pipeline_mode<synchronous>, transform_indices = @transform_4, window_bounds = array<i64: 96, 1>}, {pipeline_mode = #tpu.pipeline_mode<synchronous>, transform_indices = @transform_5, window_bounds = array<i64: 32, 32>}, {pipeline_mode = #tpu.pipeline_mode<synchronous>, transform_indices = @transform_6, window_bounds = array<i64: 32, 1>}, {pipeline_mode = #tpu.pipeline_mode<synchronous>, transform_indices = @transform_7, window_bounds = array<i64: 8, 96>}, {pipeline_mode = #tpu.pipeline_mode<synchronous>, transform_indices = @transform_8, window_bounds = array<i64: 8, 1>}, {transform_indices = @transform_9, window_bounds = array<i64: 8, 8>}]} {
    %c0 = arith.constant 0 : index
    %c0_0 = arith.constant 0 : index
    %0 = vector.load %arg1[%c0, %c0_0] : memref<8x8xf32, #tpu.memory_space<vmem>>, vector<8x8xf32>
    %c0_1 = arith.constant 0 : index
    %c0_2 = arith.constant 0 : index
    %1 = vector.load %arg2[%c0_1, %c0_2] : memref<96x8xf32, #tpu.memory_space<vmem>>, vector<96x8xf32>
    %cst = arith.constant dense<0.000000e+00> : vector<96x8xf32>
    %2 = tpu.matmul %1, %0, %cst {dimension_numbers = #tpu.dot_dimension_numbers<[1], [0], [0], [1], [0, 0, 1, 1], [], []>} : vector<96x8xf32>, vector<8x8xf32>, vector<96x8xf32> -> vector<96x8xf32>
    %c0_3 = arith.constant 0 : index
    %c0_4 = arith.constant 0 : index
    %3 = vector.load %arg3[%c0_3, %c0_4] : memref<96x1xf32, #tpu.memory_space<vmem>>, vector<96x1xf32>
    %4 = vector.broadcast %3 : vector<96x1xf32> to vector<96x8xf32>
    %5 = arith.addf %2, %4 : vector<96x8xf32>
    %6 = math.tanh %5 : vector<96x8xf32>
    %c0_5 = arith.constant 0 : index
    %c0_6 = arith.constant 0 : index
    %7 = vector.load %arg4[%c0_5, %c0_6] : memref<96x96xf32, #tpu.memory_space<vmem>>, vector<96x96xf32>
    %cst_7 = arith.constant dense<0.000000e+00> : vector<96x8xf32>
    %8 = tpu.matmul %7, %6, %cst_7 {dimension_numbers = #tpu.dot_dimension_numbers<[1], [0], [0], [1], [0, 0, 1, 1], [], []>} : vector<96x96xf32>, vector<96x8xf32>, vector<96x8xf32> -> vector<96x8xf32>
    %c0_8 = arith.constant 0 : index
    %c0_9 = arith.constant 0 : index
    %9 = vector.load %arg5[%c0_8, %c0_9] : memref<96x1xf32, #tpu.memory_space<vmem>>, vector<96x1xf32>
    %10 = vector.broadcast %9 : vector<96x1xf32> to vector<96x8xf32>
    %11 = arith.addf %8, %10 : vector<96x8xf32>
    %12 = math.tanh %11 : vector<96x8xf32>
    %c0_10 = arith.constant 0 : index
    %c0_11 = arith.constant 0 : index
    %13 = vector.load %arg6[%c0_10, %c0_11] : memref<32x32xf32, #tpu.memory_space<vmem>>, vector<32x32xf32>
    %14 = vector.extract_strided_slice %12 {offsets = [64, 0], sizes = [32, 8], strides = [1, 1]} : vector<96x8xf32> to vector<32x8xf32>
    %cst_12 = arith.constant dense<0.000000e+00> : vector<32x8xf32>
    %15 = tpu.matmul %13, %14, %cst_12 {dimension_numbers = #tpu.dot_dimension_numbers<[1], [0], [0], [1], [0, 0, 1, 1], [], []>} : vector<32x32xf32>, vector<32x8xf32>, vector<32x8xf32> -> vector<32x8xf32>
    %c0_13 = arith.constant 0 : index
    %c0_14 = arith.constant 0 : index
    %16 = vector.load %arg7[%c0_13, %c0_14] : memref<32x1xf32, #tpu.memory_space<vmem>>, vector<32x1xf32>
    %17 = vector.broadcast %16 : vector<32x1xf32> to vector<32x8xf32>
    %18 = arith.addf %15, %17 : vector<32x8xf32>
    %19 = math.tanh %18 : vector<32x8xf32>
    %20 = vector.extract_strided_slice %12 {offsets = [0, 0], sizes = [64, 8], strides = [1, 1]} : vector<96x8xf32> to vector<64x8xf32>
    %21 = tpu.concatenate %20, %19 in 0 : vector<64x8xf32>, vector<32x8xf32> -> vector<96x8xf32>
    %c0_15 = arith.constant 0 : index
    %c0_16 = arith.constant 0 : index
    %22 = vector.load %arg8[%c0_15, %c0_16] : memref<8x96xf32, #tpu.memory_space<vmem>>, vector<8x96xf32>
    %cst_17 = arith.constant dense<0.000000e+00> : vector<8x8xf32>
    %23 = tpu.matmul %22, %21, %cst_17 {dimension_numbers = #tpu.dot_dimension_numbers<[1], [0], [0], [1], [0, 0, 1, 1], [], []>} : vector<8x96xf32>, vector<96x8xf32>, vector<8x8xf32> -> vector<8x8xf32>
    %c0_18 = arith.constant 0 : index
    %c0_19 = arith.constant 0 : index
    %24 = vector.load %arg9[%c0_18, %c0_19] : memref<8x1xf32, #tpu.memory_space<vmem>>, vector<8x1xf32>
    %25 = vector.broadcast %24 : vector<8x1xf32> to vector<8x8xf32>
    %26 = arith.addf %23, %25 : vector<8x8xf32>
    %27 = vector.extract_strided_slice %0 {offsets = [0, 0], sizes = [1, 8], strides = [1, 1]} : vector<8x8xf32> to vector<1x8xf32>
    %28 = vector.extract_strided_slice %0 {offsets = [1, 0], sizes = [1, 8], strides = [1, 1]} : vector<8x8xf32> to vector<1x8xf32>
    %29 = vector.extract_strided_slice %0 {offsets = [2, 0], sizes = [1, 8], strides = [1, 1]} : vector<8x8xf32> to vector<1x8xf32>
    %30 = vector.extract_strided_slice %0 {offsets = [3, 0], sizes = [1, 8], strides = [1, 1]} : vector<8x8xf32> to vector<1x8xf32>
    %31 = vector.extract_strided_slice %0 {offsets = [4, 0], sizes = [1, 8], strides = [1, 1]} : vector<8x8xf32> to vector<1x8xf32>
    %32 = vector.extract_strided_slice %0 {offsets = [5, 0], sizes = [1, 8], strides = [1, 1]} : vector<8x8xf32> to vector<1x8xf32>
    %33 = vector.extract_strided_slice %0 {offsets = [6, 0], sizes = [1, 8], strides = [1, 1]} : vector<8x8xf32> to vector<1x8xf32>
    %34 = vector.extract_strided_slice %0 {offsets = [7, 0], sizes = [1, 8], strides = [1, 1]} : vector<8x8xf32> to vector<1x8xf32>
    %35 = vector.extract_strided_slice %26 {offsets = [0, 0], sizes = [1, 8], strides = [1, 1]} : vector<8x8xf32> to vector<1x8xf32>
    %36 = vector.extract_strided_slice %26 {offsets = [1, 0], sizes = [1, 8], strides = [1, 1]} : vector<8x8xf32> to vector<1x8xf32>
    %37 = vector.extract_strided_slice %26 {offsets = [2, 0], sizes = [1, 8], strides = [1, 1]} : vector<8x8xf32> to vector<1x8xf32>
    %38 = vector.extract_strided_slice %26 {offsets = [3, 0], sizes = [1, 8], strides = [1, 1]} : vector<8x8xf32> to vector<1x8xf32>
    %39 = vector.extract_strided_slice %26 {offsets = [4, 0], sizes = [1, 8], strides = [1, 1]} : vector<8x8xf32> to vector<1x8xf32>
    %40 = vector.extract_strided_slice %26 {offsets = [5, 0], sizes = [1, 8], strides = [1, 1]} : vector<8x8xf32> to vector<1x8xf32>
    %41 = vector.extract_strided_slice %26 {offsets = [6, 0], sizes = [1, 8], strides = [1, 1]} : vector<8x8xf32> to vector<1x8xf32>
    %42 = arith.subf %33, %35 : vector<1x8xf32>
    %43 = arith.subf %42, %37 : vector<1x8xf32>
    %44 = arith.subf %34, %36 : vector<1x8xf32>
    %45 = arith.subf %44, %38 : vector<1x8xf32>
    %46 = arith.mulf %39, %39 : vector<1x8xf32>
    %cst_20 = arith.constant 1.000000e-01 : f32
    %47 = vector.broadcast %cst_20 : f32 to vector<1x8xf32>
    %48 = arith.addf %46, %47 : vector<1x8xf32>
    %49 = arith.mulf %39, %41 : vector<1x8xf32>
    %50 = arith.mulf %41, %41 : vector<1x8xf32>
    %51 = arith.mulf %40, %40 : vector<1x8xf32>
    %52 = arith.addf %50, %51 : vector<1x8xf32>
    %cst_21 = arith.constant 1.000000e-01 : f32
    %53 = vector.broadcast %cst_21 : f32 to vector<1x8xf32>
    %54 = arith.addf %52, %53 : vector<1x8xf32>
    %cst_22 = arith.constant 0.000000e+00 : f32
    %55 = vector.broadcast %cst_22 : f32 to vector<1x8xf32>
    %56 = arith.subf %55, %28 : vector<1x8xf32>
    %57 = arith.mulf %56, %31 : vector<1x8xf32>
    %c0_23 = arith.constant 0 : index
    %c0_24 = arith.constant 0 : index
    %58 = vector.load %arg10[%c0_23, %c0_24] : memref<8x8xf32, #tpu.memory_space<vmem>>, vector<1x8xf32>
    tpu.vector_store %arg10[%c0_23, %c0_24], %57 {strides = array<i32>} : memref<8x8xf32, #tpu.memory_space<vmem>>, vector<1x8xf32>,
    %59 = arith.mulf %27, %31 : vector<1x8xf32>
    %c1 = arith.constant 1 : index
    %c0_25 = arith.constant 0 : index
    %60 = vector.load %arg10[%c1, %c0_25] : memref<8x8xf32, #tpu.memory_space<vmem>>, vector<1x8xf32>
    tpu.vector_store %arg10[%c1, %c0_25], %59 {strides = array<i32>} : memref<8x8xf32, #tpu.memory_space<vmem>>, vector<1x8xf32>,
    %cst_26 = arith.constant 0.000000e+00 : f32
    %61 = vector.broadcast %cst_26 : f32 to vector<1x8xf32>
    %62 = arith.subf %61, %30 : vector<1x8xf32>
    %63 = arith.mulf %62, %32 : vector<1x8xf32>
    %c2 = arith.constant 2 : index
    %c0_27 = arith.constant 0 : index
    %64 = vector.load %arg10[%c2, %c0_27] : memref<8x8xf32, #tpu.memory_space<vmem>>, vector<1x8xf32>
    tpu.vector_store %arg10[%c2, %c0_27], %63 {strides = array<i32>} : memref<8x8xf32, #tpu.memory_space<vmem>>, vector<1x8xf32>,
    %65 = arith.mulf %29, %32 : vector<1x8xf32>
    %c3 = arith.constant 3 : index
    %c0_28 = arith.constant 0 : index
    %66 = vector.load %arg10[%c3, %c0_28] : memref<8x8xf32, #tpu.memory_space<vmem>>, vector<1x8xf32>
    tpu.vector_store %arg10[%c3, %c0_28], %65 {strides = array<i32>} : memref<8x8xf32, #tpu.memory_space<vmem>>, vector<1x8xf32>,
    %67 = arith.mulf %48, %43 : vector<1x8xf32>
    %68 = arith.mulf %49, %45 : vector<1x8xf32>
    %69 = arith.addf %67, %68 : vector<1x8xf32>
    %c4 = arith.constant 4 : index
    %c0_29 = arith.constant 0 : index
    %70 = vector.load %arg10[%c4, %c0_29] : memref<8x8xf32, #tpu.memory_space<vmem>>, vector<1x8xf32>
    tpu.vector_store %arg10[%c4, %c0_29], %69 {strides = array<i32>} : memref<8x8xf32, #tpu.memory_space<vmem>>, vector<1x8xf32>,
    %71 = arith.mulf %49, %43 : vector<1x8xf32>
    %72 = arith.mulf %54, %45 : vector<1x8xf32>
    %73 = arith.addf %71, %72 : vector<1x8xf32>
    %c5 = arith.constant 5 : index
    %c0_30 = arith.constant 0 : index
    %74 = vector.load %arg10[%c5, %c0_30] : memref<8x8xf32, #tpu.memory_space<vmem>>, vector<1x8xf32>
    tpu.vector_store %arg10[%c5, %c0_30], %73 {strides = array<i32>} : memref<8x8xf32, #tpu.memory_space<vmem>>, vector<1x8xf32>,
    %cst_31 = arith.constant 0.000000e+00 : f32
    %75 = vector.broadcast %cst_31 : f32 to vector<2x8xf32>
    %c6 = arith.constant 6 : index
    %c0_32 = arith.constant 0 : index
    %76 = vector.load %arg10[%c6, %c0_32] : memref<8x8xf32, #tpu.memory_space<vmem>>, vector<2x8xf32>
    tpu.vector_store %arg10[%c6, %c0_32], %75 {strides = array<i32>} : memref<8x8xf32, #tpu.memory_space<vmem>>, vector<2x8xf32>,
    return
  }
  func.func @transform_0(%arg0: i32) -> (i32, i32) {
    %c0_i32 = arith.constant 0 : i32
    %c0_i32_0 = arith.constant 0 : i32
    return %c0_i32, %arg0 : i32, i32
  }
  func.func @transform_1(%arg0: i32) -> (i32, i32) {
    %c0_i32 = arith.constant 0 : i32
    %c0_i32_0 = arith.constant 0 : i32
    %c0_i32_1 = arith.constant 0 : i32
    return %c0_i32, %c0_i32_0 : i32, i32
  }
  func.func @transform_2(%arg0: i32) -> (i32, i32) {
    %c0_i32 = arith.constant 0 : i32
    %c0_i32_0 = arith.constant 0 : i32
    %c0_i32_1 = arith.constant 0 : i32
    return %c0_i32, %c0_i32_0 : i32, i32
  }
  func.func @transform_3(%arg0: i32) -> (i32, i32) {
    %c0_i32 = arith.constant 0 : i32
    %c0_i32_0 = arith.constant 0 : i32
    %c0_i32_1 = arith.constant 0 : i32
    return %c0_i32, %c0_i32_0 : i32, i32
  }
  func.func @transform_4(%arg0: i32) -> (i32, i32) {
    %c0_i32 = arith.constant 0 : i32
    %c0_i32_0 = arith.constant 0 : i32
    %c0_i32_1 = arith.constant 0 : i32
    return %c0_i32, %c0_i32_0 : i32, i32
  }
  func.func @transform_5(%arg0: i32) -> (i32, i32) {
    %c0_i32 = arith.constant 0 : i32
    %c0_i32_0 = arith.constant 0 : i32
    %c0_i32_1 = arith.constant 0 : i32
    return %c0_i32, %c0_i32_0 : i32, i32
  }
  func.func @transform_6(%arg0: i32) -> (i32, i32) {
    %c0_i32 = arith.constant 0 : i32
    %c0_i32_0 = arith.constant 0 : i32
    %c0_i32_1 = arith.constant 0 : i32
    return %c0_i32, %c0_i32_0 : i32, i32
  }
  func.func @transform_7(%arg0: i32) -> (i32, i32) {
    %c0_i32 = arith.constant 0 : i32
    %c0_i32_0 = arith.constant 0 : i32
    %c0_i32_1 = arith.constant 0 : i32
    return %c0_i32, %c0_i32_0 : i32, i32
  }
  func.func @transform_8(%arg0: i32) -> (i32, i32) {
    %c0_i32 = arith.constant 0 : i32
    %c0_i32_0 = arith.constant 0 : i32
    %c0_i32_1 = arith.constant 0 : i32
    return %c0_i32, %c0_i32_0 : i32, i32
  }
  func.func @transform_9(%arg0: i32) -> (i32, i32) {
    %c0_i32 = arith.constant 0 : i32
    %c0_i32_0 = arith.constant 0 : i32
    return %c0_i32, %arg0 : i32, i32
  }
}

</mosaic_0001>

<llo_original>
// kernel: tpu_custom_call.1
$region0: #{tpu_custom_call.1}
  #allocation0 [shape = 'u32[]', space=smem, size = 0x4, offset = 0x4, fixed_abs, tag = 'smem constant byte address 0x4 - core index']
  #allocation1 [shape = 'u32[144,128]{1,0:T(1,128)}', space=vmem, size = 0x12000, scoped, tag = 'internal scratch']
  %s0 = inlined_call_operand.vmem [shape: f32[8,8], index: 0, kind: input, shape index: {}]
  %s1 = inlined_call_operand.vmem [shape: f32[96,8], index: 1, kind: input, shape index: {}]
  %s2 = inlined_call_operand.vmem [shape: f32[96,1], index: 2, kind: input, shape index: {}]
  %s3 = inlined_call_operand.vmem [shape: f32[96,96], index: 3, kind: input, shape index: {}]
  %s4 = inlined_call_operand.vmem [shape: f32[96,1], index: 4, kind: input, shape index: {}]
  %s5 = inlined_call_operand.vmem [shape: f32[32,32], index: 5, kind: input, shape index: {}]
  %s6 = inlined_call_operand.vmem [shape: f32[32,1], index: 6, kind: input, shape index: {}]
  %s7 = inlined_call_operand.vmem [shape: f32[8,96], index: 7, kind: input, shape index: {}]
  %s8 = inlined_call_operand.vmem [shape: f32[8,1], index: 8, kind: input, shape index: {}]
  %s9 = inlined_call_operand.hbm [shape: f32[8,8], index: 9, kind: output, shape index: {}]
  %s10 = sld [smem:[#allocation0]]
  $region46: #{tpu_custom_call.1} parent=0
    _
  %s12 = ssub.s32 1, %s10
  %s13 = scalar_select 0, %s12, %s10
  $region1: #{tpu_custom_call.1} parent=0
    #allocation2 [shape = 'u8[4096]{0}', space=vmem, size = 0x1000, scoped, tag = 'output window, operand 0, single buffered']
    #allocation3 [shape = 's32[1]{0}', space=sflag, size = 0x4, scoped, tag = 'scoped memory for tpu_custom_call.1']
    %14 = vsyncpa [#allocation3], 0
    // Predicated region
    $region2: #{tpu_custom_call.1} parent=1 // pred_check
      _
    $region3: #{tpu_custom_call.1} parent=1 // pred_check_branch
      %16 = sbr.rel (0) target = $region5
    $region4: #{tpu_custom_call.1} parent=1 // pred_region
      _
    $region5: #{tpu_custom_call.1} parent=1 // pred_fallthru
      _
    // Predicated region
    $region6: #{tpu_custom_call.1} parent=1 // pred_check
      _
    $region7: #{tpu_custom_call.1} parent=1 // pred_check_branch
      %18 = sbr.rel (0) target = $region9
    $region8: #{tpu_custom_call.1} parent=1 // pred_region
      _
    $region9: #{tpu_custom_call.1} parent=1 // pred_fallthru
      _
    // Predicated region
    $region10: #{tpu_custom_call.1} parent=1 // pred_check
      _
    $region11: #{tpu_custom_call.1} parent=1 // pred_check_branch
      %20 = sbr.rel (0) target = $region13
    $region12: #{tpu_custom_call.1} parent=1 // pred_region
      _
    $region13: #{tpu_custom_call.1} parent=1 // pred_fallthru
      _
    // Predicated region
    $region14: #{tpu_custom_call.1} parent=1 // pred_check
      _
    $region15: #{tpu_custom_call.1} parent=1 // pred_check_branch
      %22 = sbr.rel (0) target = $region17
    $region16: #{tpu_custom_call.1} parent=1 // pred_region
      _
    $region17: #{tpu_custom_call.1} parent=1 // pred_fallthru
      _
    // Predicated region
    $region18: #{tpu_custom_call.1} parent=1 // pred_check
      _
    $region19: #{tpu_custom_call.1} parent=1 // pred_check_branch
      %24 = sbr.rel (0) target = $region21
    $region20: #{tpu_custom_call.1} parent=1 // pred_region
      _
    $region21: #{tpu_custom_call.1} parent=1 // pred_fallthru
      _
    // Predicated region
    $region22: #{tpu_custom_call.1} parent=1 // pred_check
      _
    $region23: #{tpu_custom_call.1} parent=1 // pred_check_branch
      %26 = sbr.rel (0) target = $region25
    $region24: #{tpu_custom_call.1} parent=1 // pred_region
      _
    $region25: #{tpu_custom_call.1} parent=1 // pred_fallthru
      _
    // Predicated region
    $region26: #{tpu_custom_call.1} parent=1 // pred_check
      _
    $region27: #{tpu_custom_call.1} parent=1 // pred_check_branch
      %28 = sbr.rel (0) target = $region29
    $region28: #{tpu_custom_call.1} parent=1 // pred_region
      _
    $region29: #{tpu_custom_call.1} parent=1 // pred_fallthru
      _
    // Predicated region
    $region30: #{tpu_custom_call.1} parent=1 // pred_check
      _
    $region31: #{tpu_custom_call.1} parent=1 // pred_check_branch
      %30 = sbr.rel (0) target = $region33
    $region32: #{tpu_custom_call.1} parent=1 // pred_region
      _
    $region33: #{tpu_custom_call.1} parent=1 // pred_fallthru
      _
    // Predicated region
    $region34: #{tpu_custom_call.1} parent=1 // pred_check
      _
    $region35: #{tpu_custom_call.1} parent=1 // pred_check_branch
      %32 = sbr.rel (0) target = $region37
    $region36: #{tpu_custom_call.1} parent=1 // pred_region
      _
    $region37: #{tpu_custom_call.1} parent=1 // pred_fallthru
      _
    %v33 = vld [vmem:[%s0] sm:$0xff]
    %v34 = vld [vmem:[%s1] sm:$0xff]
    %v35 = vld [vmem:[%s1 + $0x8] sm:$0xff]
    %v36 = vld [vmem:[%s1 + $0x10] sm:$0xff]
    %v37 = vld [vmem:[%s1 + $0x18] sm:$0xff]
    %v38 = vld [vmem:[%s1 + $0x20] sm:$0xff]
    %v39 = vld [vmem:[%s1 + $0x28] sm:$0xff]
    %v40 = vld [vmem:[%s1 + $0x30] sm:$0xff]
    %v41 = vld [vmem:[%s1 + $0x38] sm:$0xff]
    %v42 = vld [vmem:[%s1 + $0x40] sm:$0xff]
    %v43 = vld [vmem:[%s1 + $0x48] sm:$0xff]
    %v44 = vld [vmem:[%s1 + $0x50] sm:$0xff]
    %v45 = vld [vmem:[%s1 + $0x58] sm:$0xff]
    %v46 = vld [vmem:[%s2] sm:$0xff]
    %v47 = vld [vmem:[%s2 + $0x8] sm:$0xff]
    %v48 = vld [vmem:[%s2 + $0x10] sm:$0xff]
    %v49 = vld [vmem:[%s2 + $0x18] sm:$0xff]
    %v50 = vld [vmem:[%s2 + $0x20] sm:$0xff]
    %v51 = vld [vmem:[%s2 + $0x28] sm:$0xff]
    %v52 = vld [vmem:[%s2 + $0x30] sm:$0xff]
    %v53 = vld [vmem:[%s2 + $0x38] sm:$0xff]
    %v54 = vld [vmem:[%s2 + $0x40] sm:$0xff]
    %v55 = vld [vmem:[%s2 + $0x48] sm:$0xff]
    %v56 = vld [vmem:[%s2 + $0x50] sm:$0xff]
    %v57 = vld [vmem:[%s2 + $0x58] sm:$0xff]
    %59 = vset.pattern.permute.xlu0 0
    %60 = vperm.xlu0 %59, %v46
    %v61 = vpop.permute.xlu0 %60
    %64 = vset.pattern.permute.xlu0 0
    %65 = vperm.xlu0 %64, %v47
    %v66 = vpop.permute.xlu0 %65
    %69 = vset.pattern.permute.xlu0 0
    %70 = vperm.xlu0 %69, %v48
    %v71 = vpop.permute.xlu0 %70
    %74 = vset.pattern.permute.xlu0 0
    %75 = vperm.xlu0 %74, %v49
    %v76 = vpop.permute.xlu0 %75
    %79 = vset.pattern.permute.xlu0 0
    %80 = vperm.xlu0 %79, %v50
    %v81 = vpop.permute.xlu0 %80
    %84 = vset.pattern.permute.xlu0 0
    %85 = vperm.xlu0 %84, %v51
    %v86 = vpop.permute.xlu0 %85
    %89 = vset.pattern.permute.xlu0 0
    %90 = vperm.xlu0 %89, %v52
    %v91 = vpop.permute.xlu0 %90
    %94 = vset.pattern.permute.xlu0 0
    %95 = vperm.xlu0 %94, %v53
    %v96 = vpop.permute.xlu0 %95
    %99 = vset.pattern.permute.xlu0 0
    %100 = vperm.xlu0 %99, %v54
    %v101 = vpop.permute.xlu0 %100
    %104 = vset.pattern.permute.xlu0 0
    %105 = vperm.xlu0 %104, %v55
    %v106 = vpop.permute.xlu0 %105
    %109 = vset.pattern.permute.xlu0 0
    %110 = vperm.xlu0 %109, %v56
    %v111 = vpop.permute.xlu0 %110
    %114 = vset.pattern.permute.xlu0 0
    %115 = vperm.xlu0 %114, %v57
    %v116 = vpop.permute.xlu0 %115
    %vm118 = vcmask 64512
    %v120 = vsel %vm118, %v34, 0
    %v123 = vsel %vm118, %v35, 0
    %v126 = vsel %vm118, %v36, 0
    %v129 = vsel %vm118, %v37, 0
    %v132 = vsel %vm118, %v38, 0
    %v135 = vsel %vm118, %v39, 0
    %v138 = vsel %vm118, %v40, 0
    %v141 = vsel %vm118, %v41, 0
    %v144 = vsel %vm118, %v42, 0
    %v147 = vsel %vm118, %v43, 0
    %v150 = vsel %vm118, %v44, 0
    %v153 = vsel %vm118, %v45, 0
    %155 = vmatprep.subr.mxu0 0.0
    %156 = vmatpush1.msra.mxu0 %v33
    %157 = vmatprep.subr.mxu0 0.0
    %158 = vmatpush1.msra.mxu0 0.0
    %159 = vmatprep.subr.mxu0 0.0
    %160 = vmatpush1.msra.mxu0 0.0
    %161 = vmatprep.subr.mxu0 0.0
    %162 = vmatpush1.msra.mxu0 0.0
    %163 = vmatprep.subr.mxu0 0.0
    %164 = vmatpush1.msra.mxu0 0.0
    %165 = vmatprep.subr.mxu0 0.0
    %166 = vmatpush1.msra.mxu0 0.0
    %167 = vmatprep.subr.mxu0 0.0
    %168 = vmatpush1.msra.mxu0 0.0
    %169 = vmatprep.subr.mxu0 0.0
    %170 = vmatpush1.msra.mxu0 0.0
    %171 = vmatprep.subr.mxu0 0.0
    %172 = vmatpush1.msra.mxu0 0.0
    %173 = vmatprep.subr.mxu0 0.0
    %174 = vmatpush1.msra.mxu0 0.0
    %175 = vmatprep.subr.mxu0 0.0
    %176 = vmatpush1.msra.mxu0 0.0
    %177 = vmatprep.subr.mxu0 0.0
    %178 = vmatpush1.msra.mxu0 0.0
    %179 = vmatprep.subr.mxu0 0.0
    %180 = vmatpush1.msra.mxu0 0.0
    %181 = vmatprep.subr.mxu0 0.0
    %182 = vmatpush1.msra.mxu0 0.0
    %183 = vmatprep.subr.mxu0 0.0
    %184 = vmatpush1.msra.mxu0 0.0
    %185 = vmatprep.subr.mxu0 0.0
    %186 = vmatpush1.msra.mxu0 0.0
    %187 = vmatprep.subr.mxu0 0.0
    %188 = vmatpush1.msra.mxu0 0.0
    %189 = vmatprep.subr.mxu0 0.0
    %190 = vmatpush1.msra.mxu0 0.0
    %191 = vmatprep.subr.mxu0 0.0
    %192 = vmatpush1.msra.mxu0 0.0
    %193 = vmatprep.subr.mxu0 0.0
    %194 = vmatpush1.msra.mxu0 0.0
    %195 = vmatprep.subr.mxu0 0.0
    %196 = vmatpush1.msra.mxu0 0.0
    %197 = vmatprep.subr.mxu0 0.0
    %198 = vmatpush1.msra.mxu0 0.0
    %199 = vmatprep.subr.mxu0 0.0
    %200 = vmatpush1.msra.mxu0 0.0
    %201 = vmatprep.subr.mxu0 0.0
    %202 = vmatpush1.msra.mxu0 0.0
    %203 = vmatprep.subr.mxu0 0.0
    %204 = vmatpush1.msra.mxu0 0.0
    %205 = vmatprep.subr.mxu0 0.0
    %206 = vmatpush1.msra.mxu0 0.0
    %207 = vmatprep.subr.mxu0 0.0
    %208 = vmatpush1.msra.mxu0 0.0
    %209 = vmatprep.subr.mxu0 0.0
    %210 = vmatpush1.msra.mxu0 0.0
    %211 = vmatprep.subr.mxu0 0.0
    %212 = vmatpush1.msra.mxu0 0.0
    %213 = vmatprep.subr.mxu0 0.0
    %214 = vmatpush1.msra.mxu0 0.0
    %215 = vmatprep.subr.mxu0 0.0
    %216 = vmatpush1.msra.mxu0 0.0
    %217 = vmatprep.subr.mxu0 0.0
    %218 = vmatpush1.msra.mxu0 0.0
    %219 = vmatprep.mubr.f32.mxu0 0.0
    %220 = vmatmul.mubr.f32.gmra.mrb[0].mxu0 %v120
    %v221 = vpop.f32.mrb[0].mxu0
    %v222 = vadd.f32 %v61, %v221
    %v223 = vpop.f32.mrb[0].mxu0
    %224 = vmatprep.mubr.f32.mxu0 0.0
    %225 = vmatmul.mubr.f32.gmra.mrb[0].mxu0 %v123
    %v226 = vpop.f32.mrb[0].mxu0
    %v227 = vadd.f32 %v66, %v226
    %v228 = vpop.f32.mrb[0].mxu0
    %229 = vmatprep.mubr.f32.mxu0 0.0
    %230 = vmatmul.mubr.f32.gmra.mrb[0].mxu0 %v126
    %v231 = vpop.f32.mrb[0].mxu0
    %v232 = vadd.f32 %v71, %v231
    %v233 = vpop.f32.mrb[0].mxu0
    %234 = vmatprep.mubr.f32.mxu0 0.0
    %235 = vmatmul.mubr.f32.gmra.mrb[0].mxu0 %v129
    %v236 = vpop.f32.mrb[0].mxu0
    %v237 = vadd.f32 %v76, %v236
    %v238 = vpop.f32.mrb[0].mxu0
    %239 = vmatprep.mubr.f32.mxu0 0.0
    %240 = vmatmul.mubr.f32.gmra.mrb[0].mxu0 %v132
    %v241 = vpop.f32.mrb[0].mxu0
    %v242 = vadd.f32 %v81, %v241
    %v243 = vpop.f32.mrb[0].mxu0
    %244 = vmatprep.mubr.f32.mxu0 0.0
    %245 = vmatmul.mubr.f32.gmra.mrb[0].mxu0 %v135
    %v246 = vpop.f32.mrb[0].mxu0
    %v247 = vadd.f32 %v86, %v246
    %v248 = vpop.f32.mrb[0].mxu0
    %249 = vmatprep.mubr.f32.mxu0 0.0
    %250 = vmatmul.mubr.f32.gmra.mrb[0].mxu0 %v138
    %v251 = vpop.f32.mrb[0].mxu0
    %v252 = vadd.f32 %v91, %v251
    %v253 = vpop.f32.mrb[0].mxu0
    %254 = vmatprep.mubr.f32.mxu0 0.0
    %255 = vmatmul.mubr.f32.gmra.mrb[0].mxu0 %v141
    %v256 = vpop.f32.mrb[0].mxu0
    %v257 = vadd.f32 %v96, %v256
    %v258 = vpop.f32.mrb[0].mxu0
    %259 = vmatprep.mubr.f32.mxu0 0.0
    %260 = vmatmul.mubr.f32.gmra.mrb[0].mxu0 %v144
    %v261 = vpop.f32.mrb[0].mxu0
    %v262 = vadd.f32 %v101, %v261
    %v263 = vpop.f32.mrb[0].mxu0
    %264 = vmatprep.mubr.f32.mxu0 0.0
    %265 = vmatmul.mubr.f32.gmra.mrb[0].mxu0 %v147
    %v266 = vpop.f32.mrb[0].mxu0
    %v267 = vadd.f32 %v106, %v266
    %v268 = vpop.f32.mrb[0].mxu0
    %269 = vmatprep.mubr.f32.mxu0 0.0
    %270 = vmatmul.mubr.f32.gmra.mrb[0].mxu0 %v150
    %v271 = vpop.f32.mrb[0].mxu0
    %v272 = vadd.f32 %v111, %v271
    %v273 = vpop.f32.mrb[0].mxu0
    %274 = vmatprep.mubr.f32.mxu0 0.0
    %275 = vmatmul.mubr.f32.gmra.mrb[0].mxu0 %v153
    %v276 = vpop.f32.mrb[0].mxu0
    %v277 = vadd.f32 %v116, %v276
    %v278 = vpop.f32.mrb[0].mxu0
    %279 = vdwg.mxu0
    %v280 = vtanh.pop %v222
    %v281 = vtanh.pop %v227
    %v282 = vtanh.pop %v232
    %v283 = vtanh.pop %v237
    %v284 = vtanh.pop %v242
    %v285 = vtanh.pop %v247
    %v286 = vtanh.pop %v252
    %v287 = vtanh.pop %v257
    %v288 = vtanh.pop %v262
    %v289 = vtanh.pop %v267
    %v290 = vtanh.pop %v272
    %v291 = vtanh.pop %v277
    %v292 = vld [vmem:[%s3] sm:$0xff]
    %v293 = vld [vmem:[%s3 + $0x8] sm:$0xff]
    %v294 = vld [vmem:[%s3 + $0x10] sm:$0xff]
    %v295 = vld [vmem:[%s3 + $0x18] sm:$0xff]
    %v296 = vld [vmem:[%s3 + $0x20] sm:$0xff]
    %v297 = vld [vmem:[%s3 + $0x28] sm:$0xff]
    %v298 = vld [vmem:[%s3 + $0x30] sm:$0xff]
    %v299 = vld [vmem:[%s3 + $0x38] sm:$0xff]
    %v300 = vld [vmem:[%s3 + $0x40] sm:$0xff]
    %v301 = vld [vmem:[%s3 + $0x48] sm:$0xff]
    %v302 = vld [vmem:[%s3 + $0x50] sm:$0xff]
    %v303 = vld [vmem:[%s3 + $0x58] sm:$0xff]
    %v304 = vld [vmem:[%s4] sm:$0xff]
    %v305 = vld [vmem:[%s4 + $0x8] sm:$0xff]
    %v306 = vld [vmem:[%s4 + $0x10] sm:$0xff]
    %v307 = vld [vmem:[%s4 + $0x18] sm:$0xff]
    %v308 = vld [vmem:[%s4 + $0x20] sm:$0xff]
    %v309 = vld [vmem:[%s4 + $0x28] sm:$0xff]
    %v310 = vld [vmem:[%s4 + $0x30] sm:$0xff]
    %v311 = vld [vmem:[%s4 + $0x38] sm:$0xff]
    %v312 = vld [vmem:[%s4 + $0x40] sm:$0xff]
    %v313 = vld [vmem:[%s4 + $0x48] sm:$0xff]
    %v314 = vld [vmem:[%s4 + $0x50] sm:$0xff]
    %v315 = vld [vmem:[%s4 + $0x58] sm:$0xff]
    %317 = vset.pattern.permute.xlu0 0
    %318 = vperm.xlu0 %317, %v304
    %v319 = vpop.permute.xlu0 %318
    %322 = vset.pattern.permute.xlu0 0
    %323 = vperm.xlu0 %322, %v305
    %v324 = vpop.permute.xlu0 %323
    %327 = vset.pattern.permute.xlu0 0
    %328 = vperm.xlu0 %327, %v306
    %v329 = vpop.permute.xlu0 %328
    %332 = vset.pattern.permute.xlu0 0
    %333 = vperm.xlu0 %332, %v307
    %v334 = vpop.permute.xlu0 %333
    %337 = vset.pattern.permute.xlu0 0
    %338 = vperm.xlu0 %337, %v308
    %v339 = vpop.permute.xlu0 %338
    %342 = vset.pattern.permute.xlu0 0
    %343 = vperm.xlu0 %342, %v309
    %v344 = vpop.permute.xlu0 %343
    %347 = vset.pattern.permute.xlu0 0
    %348 = vperm.xlu0 %347, %v310
    %v349 = vpop.permute.xlu0 %348
    %352 = vset.pattern.permute.xlu0 0
    %353 = vperm.xlu0 %352, %v311
    %v354 = vpop.permute.xlu0 %353
    %357 = vset.pattern.permute.xlu0 0
    %358 = vperm.xlu0 %357, %v312
    %v359 = vpop.permute.xlu0 %358
    %362 = vset.pattern.permute.xlu0 0
    %363 = vperm.xlu0 %362, %v313
    %v364 = vpop.permute.xlu0 %363
    %367 = vset.pattern.permute.xlu0 0
    %368 = vperm.xlu0 %367, %v314
    %v369 = vpop.permute.xlu0 %368
    %372 = vset.pattern.permute.xlu0 0
    %373 = vperm.xlu0 %372, %v315
    %v374 = vpop.permute.xlu0 %373
    %vm376 = vcmask 785408
    %v378 = vsel %vm376, %v292, 0
    %v381 = vsel %vm376, %v293, 0
    %v384 = vsel %vm376, %v294, 0
    %v387 = vsel %vm376, %v295, 0
    %v390 = vsel %vm376, %v296, 0
    %v393 = vsel %vm376, %v297, 0
    %v396 = vsel %vm376, %v298, 0
    %v399 = vsel %vm376, %v299, 0
    %v402 = vsel %vm376, %v300, 0
    %v405 = vsel %vm376, %v301, 0
    %v408 = vsel %vm376, %v302, 0
    %v411 = vsel %vm376, %v303, 0
    %413 = vmatprep.subr.mxu0 0.0
    %414 = vmatpush1.msra.mxu0 %v280
    %415 = vmatprep.subr.mxu0 0.0
    %416 = vmatpush1.msra.mxu0 %v281
    %417 = vmatprep.subr.mxu0 0.0
    %418 = vmatpush1.msra.mxu0 %v282
    %419 = vmatprep.subr.mxu0 0.0
    %420 = vmatpush1.msra.mxu0 %v283
    %421 = vmatprep.subr.mxu0 0.0
    %422 = vmatpush1.msra.mxu0 %v284
    %423 = vmatprep.subr.mxu0 0.0
    %424 = vmatpush1.msra.mxu0 %v285
    %425 = vmatprep.subr.mxu0 0.0
    %426 = vmatpush1.msra.mxu0 %v286
    %427 = vmatprep.subr.mxu0 0.0
    %428 = vmatpush1.msra.mxu0 %v287
    %429 = vmatprep.subr.mxu0 0.0
    %430 = vmatpush1.msra.mxu0 %v288
    %431 = vmatprep.subr.mxu0 0.0
    %432 = vmatpush1.msra.mxu0 %v289
    %433 = vmatprep.subr.mxu0 0.0
    %434 = vmatpush1.msra.mxu0 %v290
    %435 = vmatprep.subr.mxu0 0.0
    %436 = vmatpush1.msra.mxu0 %v291
    %437 = vmatprep.subr.mxu0 0.0
    %438 = vmatpush1.msra.mxu0 0.0
    %439 = vmatprep.subr.mxu0 0.0
    %440 = vmatpush1.msra.mxu0 0.0
    %441 = vmatprep.subr.mxu0 0.0
    %442 = vmatpush1.msra.mxu0 0.0
    %443 = vmatprep.subr.mxu0 0.0
    %444 = vmatpush1.msra.mxu0 0.0
    %445 = vmatprep.subr.mxu0 0.0
    %446 = vmatpush1.msra.mxu0 0.0
    %447 = vmatprep.subr.mxu0 0.0
    %448 = vmatpush1.msra.mxu0 0.0
    %449 = vmatprep.subr.mxu0 0.0
    %450 = vmatpush1.msra.mxu0 0.0
    %451 = vmatprep.subr.mxu0 0.0
    %452 = vmatpush1.msra.mxu0 0.0
    %453 = vmatprep.subr.mxu0 0.0
    %454 = vmatpush1.msra.mxu0 0.0
    %455 = vmatprep.subr.mxu0 0.0
    %456 = vmatpush1.msra.mxu0 0.0
    %457 = vmatprep.subr.mxu0 0.0
    %458 = vmatpush1.msra.mxu0 0.0
    %459 = vmatprep.subr.mxu0 0.0
    %460 = vmatpush1.msra.mxu0 0.0
    %461 = vmatprep.subr.mxu0 0.0
    %462 = vmatpush1.msra.mxu0 0.0
    %463 = vmatprep.subr.mxu0 0.0
    %464 = vmatpush1.msra.mxu0 0.0
    %465 = vmatprep.subr.mxu0 0.0
    %466 = vmatpush1.msra.mxu0 0.0
    %467 = vmatprep.subr.mxu0 0.0
    %468 = vmatpush1.msra.mxu0 0.0
    %469 = vmatprep.subr.mxu0 0.0
    %470 = vmatpush1.msra.mxu0 0.0
    %471 = vmatprep.subr.mxu0 0.0
    %472 = vmatpush1.msra.mxu0 0.0
    %473 = vmatprep.subr.mxu0 0.0
    %474 = vmatpush1.msra.mxu0 0.0
    %475 = vmatprep.subr.mxu0 0.0
    %476 = vmatpush1.msra.mxu0 0.0
    %477 = vmatprep.mubr.f32.mxu0 0.0
    %478 = vmatmul.mubr.f32.gmra.mrb[0].mxu0 %v378
    %v479 = vpop.f32.mrb[0].mxu0
    %v480 = vadd.f32 %v319, %v479
    %v481 = vpop.f32.mrb[0].mxu0
    %482 = vmatprep.mubr.f32.mxu0 0.0
    %483 = vmatmul.mubr.f32.gmra.mrb[0].mxu0 %v381
    %v484 = vpop.f32.mrb[0].mxu0
    %v485 = vadd.f32 %v324, %v484
    %v486 = vpop.f32.mrb[0].mxu0
    %487 = vmatprep.mubr.f32.mxu0 0.0
    %488 = vmatmul.mubr.f32.gmra.mrb[0].mxu0 %v384
    %v489 = vpop.f32.mrb[0].mxu0
    %v490 = vadd.f32 %v329, %v489
    %v491 = vpop.f32.mrb[0].mxu0
    %492 = vmatprep.mubr.f32.mxu0 0.0
    %493 = vmatmul.mubr.f32.gmra.mrb[0].mxu0 %v387
    %v494 = vpop.f32.mrb[0].mxu0
    %v495 = vadd.f32 %v334, %v494
    %v496 = vpop.f32.mrb[0].mxu0
    %497 = vmatprep.mubr.f32.mxu0 0.0
    %498 = vmatmul.mubr.f32.gmra.mrb[0].mxu0 %v390
    %v499 = vpop.f32.mrb[0].mxu0
    %v500 = vadd.f32 %v339, %v499
    %v501 = vpop.f32.mrb[0].mxu0
    %502 = vmatprep.mubr.f32.mxu0 0.0
    %503 = vmatmul.mubr.f32.gmra.mrb[0].mxu0 %v393
    %v504 = vpop.f32.mrb[0].mxu0
    %v505 = vadd.f32 %v344, %v504
    %v506 = vpop.f32.mrb[0].mxu0
    %507 = vmatprep.mubr.f32.mxu0 0.0
    %508 = vmatmul.mubr.f32.gmra.mrb[0].mxu0 %v396
    %v509 = vpop.f32.mrb[0].mxu0
    %v510 = vadd.f32 %v349, %v509
    %v511 = vpop.f32.mrb[0].mxu0
    %512 = vmatprep.mubr.f32.mxu0 0.0
    %513 = vmatmul.mubr.f32.gmra.mrb[0].mxu0 %v399
    %v514 = vpop.f32.mrb[0].mxu0
    %v515 = vadd.f32 %v354, %v514
    %v516 = vpop.f32.mrb[0].mxu0
    %517 = vmatprep.mubr.f32.mxu0 0.0
    %518 = vmatmul.mubr.f32.gmra.mrb[0].mxu0 %v402
    %v519 = vpop.f32.mrb[0].mxu0
    %v520 = vadd.f32 %v359, %v519
    %v521 = vpop.f32.mrb[0].mxu0
    %522 = vmatprep.mubr.f32.mxu0 0.0
    %523 = vmatmul.mubr.f32.gmra.mrb[0].mxu0 %v405
    %v524 = vpop.f32.mrb[0].mxu0
    %v525 = vadd.f32 %v364, %v524
    %v526 = vpop.f32.mrb[0].mxu0
    %527 = vmatprep.mubr.f32.mxu0 0.0
    %528 = vmatmul.mubr.f32.gmra.mrb[0].mxu0 %v408
    %v529 = vpop.f32.mrb[0].mxu0
    %v530 = vadd.f32 %v369, %v529
    %v531 = vpop.f32.mrb[0].mxu0
    %532 = vmatprep.mubr.f32.mxu0 0.0
    %533 = vmatmul.mubr.f32.gmra.mrb[0].mxu0 %v411
    %v534 = vpop.f32.mrb[0].mxu0
    %v535 = vadd.f32 %v374, %v534
    %v536 = vpop.f32.mrb[0].mxu0
    %537 = vdwg.mxu0
    %v538 = vtanh.pop %v480
    %v539 = vtanh.pop %v485
    %v540 = vtanh.pop %v490
    %v541 = vtanh.pop %v495
    %v542 = vtanh.pop %v500
    %v543 = vtanh.pop %v505
    %v544 = vtanh.pop %v510
    %v545 = vtanh.pop %v515
    %v546 = vtanh.pop %v520
    %v547 = vtanh.pop %v525
    %v548 = vtanh.pop %v530
    %v549 = vtanh.pop %v535
    %v550 = vld [vmem:[%s5] sm:$0xff]
    %v551 = vld [vmem:[%s5 + $0x8] sm:$0xff]
    %v552 = vld [vmem:[%s5 + $0x10] sm:$0xff]
    %v553 = vld [vmem:[%s5 + $0x18] sm:$0xff]
    %v554 = vld [vmem:[%s6] sm:$0xff]
    %v555 = vld [vmem:[%s6 + $0x8] sm:$0xff]
    %v556 = vld [vmem:[%s6 + $0x10] sm:$0xff]
    %v557 = vld [vmem:[%s6 + $0x18] sm:$0xff]
    %559 = vset.pattern.permute.xlu0 0
    %560 = vperm.xlu0 %559, %v554
    %v561 = vpop.permute.xlu0 %560
    %564 = vset.pattern.permute.xlu0 0
    %565 = vperm.xlu0 %564, %v555
    %v566 = vpop.permute.xlu0 %565
    %569 = vset.pattern.permute.xlu0 0
    %570 = vperm.xlu0 %569, %v556
    %v571 = vpop.permute.xlu0 %570
    %574 = vset.pattern.permute.xlu0 0
    %575 = vperm.xlu0 %574, %v557
    %v576 = vpop.permute.xlu0 %575
    %vm578 = vcmask 261120
    %v580 = vsel %vm578, %v550, 0
    %v583 = vsel %vm578, %v551, 0
    %v586 = vsel %vm578, %v552, 0
    %v589 = vsel %vm578, %v553, 0
    %591 = vmatprep.subr.mxu0 0.0
    %592 = vmatpush1.msra.mxu0 %v546
    %593 = vmatprep.subr.mxu0 0.0
    %594 = vmatpush1.msra.mxu0 %v547
    %595 = vmatprep.subr.mxu0 0.0
    %596 = vmatpush1.msra.mxu0 %v548
    %597 = vmatprep.subr.mxu0 0.0
    %598 = vmatpush1.msra.mxu0 %v549
    %599 = vmatprep.subr.mxu0 0.0
    %600 = vmatpush1.msra.mxu0 0.0
    %601 = vmatprep.subr.mxu0 0.0
    %602 = vmatpush1.msra.mxu0 0.0
    %603 = vmatprep.subr.mxu0 0.0
    %604 = vmatpush1.msra.mxu0 0.0
    %605 = vmatprep.subr.mxu0 0.0
    %606 = vmatpush1.msra.mxu0 0.0
    %607 = vmatprep.subr.mxu0 0.0
    %608 = vmatpush1.msra.mxu0 0.0
    %609 = vmatprep.subr.mxu0 0.0
    %610 = vmatpush1.msra.mxu0 0.0
    %611 = vmatprep.subr.mxu0 0.0
    %612 = vmatpush1.msra.mxu0 0.0
    %613 = vmatprep.subr.mxu0 0.0
    %614 = vmatpush1.msra.mxu0 0.0
    %615 = vmatprep.subr.mxu0 0.0
    %616 = vmatpush1.msra.mxu0 0.0
    %617 = vmatprep.subr.mxu0 0.0
    %618 = vmatpush1.msra.mxu0 0.0
    %619 = vmatprep.subr.mxu0 0.0
    %620 = vmatpush1.msra.mxu0 0.0
    %621 = vmatprep.subr.mxu0 0.0
    %622 = vmatpush1.msra.mxu0 0.0
    %623 = vmatprep.subr.mxu0 0.0
    %624 = vmatpush1.msra.mxu0 0.0
    %625 = vmatprep.subr.mxu0 0.0
    %626 = vmatpush1.msra.mxu0 0.0
    %627 = vmatprep.subr.mxu0 0.0
    %628 = vmatpush1.msra.mxu0 0.0
    %629 = vmatprep.subr.mxu0 0.0
    %630 = vmatpush1.msra.mxu0 0.0
    %631 = vmatprep.subr.mxu0 0.0
    %632 = vmatpush1.msra.mxu0 0.0
    %633 = vmatprep.subr.mxu0 0.0
    %634 = vmatpush1.msra.mxu0 0.0
    %635 = vmatprep.subr.mxu0 0.0
    %636 = vmatpush1.msra.mxu0 0.0
    %637 = vmatprep.subr.mxu0 0.0
    %638 = vmatpush1.msra.mxu0 0.0
    %639 = vmatprep.subr.mxu0 0.0
    %640 = vmatpush1.msra.mxu0 0.0
    %641 = vmatprep.subr.mxu0 0.0
    %642 = vmatpush1.msra.mxu0 0.0
    %643 = vmatprep.subr.mxu0 0.0
    %644 = vmatpush1.msra.mxu0 0.0
    %645 = vmatprep.subr.mxu0 0.0
    %646 = vmatpush1.msra.mxu0 0.0
    %647 = vmatprep.subr.mxu0 0.0
    %648 = vmatpush1.msra.mxu0 0.0
    %649 = vmatprep.subr.mxu0 0.0
    %650 = vmatpush1.msra.mxu0 0.0
    %651 = vmatprep.subr.mxu0 0.0
    %652 = vmatpush1.msra.mxu0 0.0
    %653 = vmatprep.subr.mxu0 0.0
    %654 = vmatpush1.msra.mxu0 0.0
    %655 = vmatprep.mubr.f32.mxu0 0.0
    %656 = vmatmul.mubr.f32.gmra.mrb[0].mxu0 %v580
    %v657 = vpop.f32.mrb[0].mxu0
    %v658 = vadd.f32 %v561, %v657
    %v659 = vpop.f32.mrb[0].mxu0
    %660 = vmatprep.mubr.f32.mxu0 0.0
    %661 = vmatmul.mubr.f32.gmra.mrb[0].mxu0 %v583
    %v662 = vpop.f32.mrb[0].mxu0
    %v663 = vadd.f32 %v566, %v662
    %v664 = vpop.f32.mrb[0].mxu0
    %665 = vmatprep.mubr.f32.mxu0 0.0
    %666 = vmatmul.mubr.f32.gmra.mrb[0].mxu0 %v586
    %v667 = vpop.f32.mrb[0].mxu0
    %v668 = vadd.f32 %v571, %v667
    %v669 = vpop.f32.mrb[0].mxu0
    %670 = vmatprep.mubr.f32.mxu0 0.0
    %671 = vmatmul.mubr.f32.gmra.mrb[0].mxu0 %v589
    %v672 = vpop.f32.mrb[0].mxu0
    %v673 = vadd.f32 %v576, %v672
    %v674 = vpop.f32.mrb[0].mxu0
    %675 = vdwg.mxu0
    %v676 = vtanh.pop %v658
    %v677 = vtanh.pop %v663
    %v678 = vtanh.pop %v668
    %v679 = vtanh.pop %v673
    %v680 = vld [vmem:[%s7] sm:$0xff]
    %v681 = vld [vmem:[%s8] sm:$0xff]
    %683 = vset.pattern.permute.xlu0 0
    %684 = vperm.xlu0 %683, %v681
    %v685 = vpop.permute.xlu0 %684
    %v688 = vsel %vm376, %v680, 0
    %690 = vmatprep.subr.mxu0 0.0
    %691 = vmatpush1.msra.mxu0 %v538
    %692 = vmatprep.subr.mxu0 0.0
    %693 = vmatpush1.msra.mxu0 %v539
    %694 = vmatprep.subr.mxu0 0.0
    %695 = vmatpush1.msra.mxu0 %v540
    %696 = vmatprep.subr.mxu0 0.0
    %697 = vmatpush1.msra.mxu0 %v541
    %698 = vmatprep.subr.mxu0 0.0
    %699 = vmatpush1.msra.mxu0 %v542
    %700 = vmatprep.subr.mxu0 0.0
    %701 = vmatpush1.msra.mxu0 %v543
    %702 = vmatprep.subr.mxu0 0.0
    %703 = vmatpush1.msra.mxu0 %v544
    %704 = vmatprep.subr.mxu0 0.0
    %705 = vmatpush1.msra.mxu0 %v545
    %706 = vmatprep.subr.mxu0 0.0
    %707 = vmatpush1.msra.mxu0 %v676
    %708 = vmatprep.subr.mxu0 0.0
    %709 = vmatpush1.msra.mxu0 %v677
    %710 = vmatprep.subr.mxu0 0.0
    %711 = vmatpush1.msra.mxu0 %v678
    %712 = vmatprep.subr.mxu0 0.0
    %713 = vmatpush1.msra.mxu0 %v679
    %714 = vmatprep.subr.mxu0 0.0
    %715 = vmatpush1.msra.mxu0 0.0
    %716 = vmatprep.subr.mxu0 0.0
    %717 = vmatpush1.msra.mxu0 0.0
    %718 = vmatprep.subr.mxu0 0.0
    %719 = vmatpush1.msra.mxu0 0.0
    %720 = vmatprep.subr.mxu0 0.0
    %721 = vmatpush1.msra.mxu0 0.0
    %722 = vmatprep.subr.mxu0 0.0
    %723 = vmatpush1.msra.mxu0 0.0
    %724 = vmatprep.subr.mxu0 0.0
    %725 = vmatpush1.msra.mxu0 0.0
    %726 = vmatprep.subr.mxu0 0.0
    %727 = vmatpush1.msra.mxu0 0.0
    %728 = vmatprep.subr.mxu0 0.0
    %729 = vmatpush1.msra.mxu0 0.0
    %730 = vmatprep.subr.mxu0 0.0
    %731 = vmatpush1.msra.mxu0 0.0
    %732 = vmatprep.subr.mxu0 0.0
    %733 = vmatpush1.msra.mxu0 0.0
    %734 = vmatprep.subr.mxu0 0.0
    %735 = vmatpush1.msra.mxu0 0.0
    %736 = vmatprep.subr.mxu0 0.0
    %737 = vmatpush1.msra.mxu0 0.0
    %738 = vmatprep.subr.mxu0 0.0
    %739 = vmatpush1.msra.mxu0 0.0
    %740 = vmatprep.subr.mxu0 0.0
    %741 = vmatpush1.msra.mxu0 0.0
    %742 = vmatprep.subr.mxu0 0.0
    %743 = vmatpush1.msra.mxu0 0.0
    %744 = vmatprep.subr.mxu0 0.0
    %745 = vmatpush1.msra.mxu0 0.0
    %746 = vmatprep.subr.mxu0 0.0
    %747 = vmatpush1.msra.mxu0 0.0
    %748 = vmatprep.subr.mxu0 0.0
    %749 = vmatpush1.msra.mxu0 0.0
    %750 = vmatprep.subr.mxu0 0.0
    %751 = vmatpush1.msra.mxu0 0.0
    %752 = vmatprep.subr.mxu0 0.0
    %753 = vmatpush1.msra.mxu0 0.0
    %754 = vmatprep.mubr.f32.mxu0 0.0
    %755 = vmatmul.mubr.f32.gmra.mrb[0].mxu0 %v688
    %v756 = vpop.f32.mrb[0].mxu0
    %v757 = vadd.f32 %v685, %v756
    %v758 = vpop.f32.mrb[0].mxu0
    %759 = vdwg.mxu0
    %v761 = vrot.slane %v757, 2
    %v763 = vsub.f32 %v33, %v761
    %v764 = vrot.slane %v757, 4
    %v766 = vsub.f32 %v763, %v764
    %v767 = vmul.f32 %v757, %v757
    %v768 = vadd.f32 %v767, 0.1
    %v769 = vmul.f32 %v757, %v761
    %v771 = vrot.slane %v767, 7
    %v773 = vadd.f32 %v767, %v771
    %v774 = vadd.f32 %v773, 0.1
    %v775 = vsub.f32 0.0, %v33
    %v777 = vrot.slane %v33, 3
    %v779 = vmul.f32 %v775, %v777
    %vm780 = vcmask 58369
    %781 = vst.msk [vmem:[#allocation2 - $0x1] sm:$0x2] %vm780, %v779
    %v782 = vrot.slane %v33, 4
    %v784 = vmul.f32 %v33, %v782
    %vm785 = vcmask 57344
    %786 = vst.msk [vmem:[#allocation2 + $0x1] sm:$0x1] %vm785, %v784
    %v787 = vrot.slane %v33, 2
    %v789 = vmul.f32 %v775, %v787
    %vm790 = vcmask 60419
    %791 = vst.msk [vmem:[#allocation2 - $0x1] sm:$0x8] %vm790, %v789
    %v792 = vmul.f32 %v33, %v777
    %vm793 = vcmask 59394
    %794 = vst.msk [vmem:[#allocation2 + $0x1] sm:$0x4] %vm793, %v792
    %v796 = vrot.slane %v766, 2
    %v798 = vmul.f32 %v768, %v796
    %v799 = vrot.slane %v766, 3
    %v801 = vmul.f32 %v769, %v799
    %v802 = vadd.f32 %v798, %v801
    %vm803 = vcmask 61444
    %804 = vst.msk [vmem:[#allocation2] sm:$0x10] %vm803, %v802
    %v805 = vmul.f32 %v769, %v796
    %v806 = vrot.slane %v766, 1
    %v808 = vmul.f32 %v774, %v806
    %v810 = vrot.slane %v808, 2
    %v812 = vadd.f32 %v805, %v810
    %813 = vst.msk [vmem:[#allocation2 + $0x1] sm:$0x10] %vm803, %v812
    %vm814 = vcmask 58368
    %815 = vst.msk [vmem:[#allocation2 + $0x6] sm:$0x3] %vm814, 0.0
    // Predicated region
    $region38: #{tpu_custom_call.1} parent=1 // pred_check
      _
    $region39: #{tpu_custom_call.1} parent=1 // pred_check_branch
      %817 = sbr.rel (0) target = $region41
    $region40: #{tpu_custom_call.1} parent=1 // pred_region
      %s819 = ssub.s32 128, 128
      %820 = vsyncadd [#allocation3], %s819
      %s822 = sshll.u32 [#allocation2], 4
      %s823 = int_to_ptr.vmem [resolvable:$true] %s822
      %825 = dma.vmem_to_hbm [thread:$0]  %s823, 128, %s9, [#allocation3]
    $region41: #{tpu_custom_call.1} parent=1 // pred_fallthru
      _
    // Predicated region
    $region42: #{tpu_custom_call.1} parent=1 // pred_check
      _
    $region43: #{tpu_custom_call.1} parent=1 // pred_check_branch
      %827 = sbr.rel (0) target = $region45
    $region44: #{tpu_custom_call.1} parent=1 // pred_region
      %828 = dma.done [#allocation3], 128
    $region45: #{tpu_custom_call.1} parent=1 // pred_fallthru
      _
    %829 = vsyncpa [#allocation3], 1

</llo_original>
